<compile_context>
chip_gen: v7x
topology: tpu7x:2x2x1
jax: 0.10.0
libtpu: 0.0.40
codegen_flags: <defaults>
</compile_context>

<pallas_src>
import jax
import jax.numpy as jnp
from jax import lax
from jax.experimental import pallas as pl
from jax.experimental.pallas import tpu as pltpu


def cfm_kernel(i_ref, j_ref, emb_ref, bias_ref, c_ref, out_ref):
    """One batch tile of the CFM forward pass.

    i_ref, j_ref : (TB, 1) int32   row / col indices for this tile (streamed)
    emb_ref      : (n, D)  f32     full interaction-embedding table (VMEM resident)
    bias_ref     : (1, n)  f32     full bias table, lane-major (VMEM resident)
    c_ref        : (1,)    f32     global offset (SMEM)
    out_ref      : (TB, 1) f32     logodds for this tile
    """
    tb = i_ref.shape[0]
    n = emb_ref.shape[0]

    emb = emb_ref[...]                                    # (n, D)
    ids = lax.broadcasted_iota(jnp.int32, (tb, n), 1)     # (TB, n)

    # One-hot rows for the gathered indices (broadcast compare on the VPU).
    oh_i = (i_ref[...] == ids).astype(emb.dtype)          # (TB, n)
    oh_j = (j_ref[...] == ids).astype(emb.dtype)          # (TB, n)

    # Fused gather: one-hot @ table on the MXU (table never leaves VMEM).
    ei = jnp.dot(oh_i, emb, preferred_element_type=jnp.float32)   # (TB, D)
    ej = jnp.dot(oh_j, emb, preferred_element_type=jnp.float32)   # (TB, D)

    # Bias gather stays on the VPU/XLU: broadcast-multiply + lane reduce.
    bias_row = bias_ref[...]                               # (1, n)
    bi = jnp.sum(oh_i * bias_row, axis=-1, keepdims=True)  # (TB, 1)
    bj = jnp.sum(oh_j * bias_row, axis=-1, keepdims=True)  # (TB, 1)

    # Row-wise interaction <emb[i], emb[j]>.
    mij = jnp.sum(ei * ej, axis=-1, keepdims=True)         # (TB, 1)

    out_ref[...] = (c_ref[0] + bi + bj + mij).astype(out_ref.dtype)


def cfm_forward(i, j, emb, bias, c, *, tb=1024):
    """Pallas-backed CFM forward.

    i, j : int32 (B,) index vectors
    emb  : float32 (n, D) interaction embedding table (NuclearEmbedding weights)
    bias : float32 (n, 1) bias embedding table
    c    : float32 (1,)   global offset
    returns float32 (B,) logodds
    """
    B = i.shape[0]
    n, D = emb.shape

    # Pick a batch tile: block second-minor dim must be a multiple of 8 or the
    # full extent. Remainder blocks are handled by Pallas masking.
    tb = min(tb, B)
    if tb % 8 != 0:
        tb = B
    grid = (pl.cdiv(B, tb),)

    i2 = i.reshape(B, 1).astype(jnp.int32)
    j2 = j.reshape(B, 1).astype(jnp.int32)
    emb_f32 = emb.astype(jnp.float32)
    bias_row = bias.reshape(1, n).astype(jnp.float32)
    c1 = c.reshape(1).astype(jnp.float32)

    out = pl.pallas_call(
        cfm_kernel,
        out_shape=jax.ShapeDtypeStruct((B, 1), jnp.float32),
        grid=grid,
        in_specs=[
            pl.BlockSpec((tb, 1), lambda b: (b, 0)),            # i tile (streamed)
            pl.BlockSpec((tb, 1), lambda b: (b, 0)),            # j tile (streamed)
            pl.BlockSpec((n, D), lambda b: (0, 0)),             # emb table, VMEM resident
            pl.BlockSpec((1, n), lambda b: (0, 0)),             # bias row, VMEM resident
            pl.BlockSpec(memory_space=pltpu.MemorySpace.SMEM),  # c scalar in SMEM
        ],
        out_specs=pl.BlockSpec((tb, 1), lambda b: (b, 0)),
        compiler_params=pltpu.CompilerParams(
            dimension_semantics=("parallel",),
        ),
    )(i2, j2, emb_f32, bias_row, c1)
    return out[:, 0]


def cfm_forward_ref(i, j, emb, bias, c):
    """Pure-JAX reference for correctness check."""
    bi = bias[i][:, 0]
    bj = bias[j][:, 0]
    mij = jnp.sum(emb[i] * emb[j], axis=-1)
    return c[0] + bi + bj + mij


if __name__ == "__main__":
    # Small shapes consistent with the module: n items, k factors, dim = k*10.
    n = 64        # number of entities
    k = 8         # factorization rank parameter -> embedding dim = k*10 = 80
    d = k * 10
    B = 256       # batch of (i, j) pairs

    key = jax.random.PRNGKey(0)
    k_emb, k_bias, k_c, k_i, k_j = jax.random.split(key, 5)

    emb = jax.random.normal(k_emb, (n, d), dtype=jnp.float32) * 0.1
    bias = jax.random.normal(k_bias, (n, 1), dtype=jnp.float32) * 0.1
    c = jax.random.normal(k_c, (1,), dtype=jnp.float32)

    i = jax.random.randint(k_i, (B,), 0, n, dtype=jnp.int32)
    j = jax.random.randint(k_j, (B,), 0, n, dtype=jnp.int32)

    # tb=128 -> grid=(2,) on this small demo; defaults to 1024-row tiles for
    # production-sized batches (fits comfortably under the v7x VMEM budget).
    logodds = cfm_forward(i, j, emb, bias, c, tb=128)
    jax.block_until_ready(logodds)

    ref = cfm_forward_ref(i, j, emb, bias, c)
    assert logodds.shape == (B,)
    assert jnp.allclose(logodds, ref, atol=1e-4, rtol=1e-4), (logodds, ref)

    print("KERNEL_OK")
</pallas_src>

<mosaic_0001>
module attributes {stable_mosaic.version = 11 : i64} {
  func.func @cfm_kernel(%arg0: i32, %arg1: memref<128x1xi32, #tpu.memory_space<vmem>>, %arg2: memref<128x1xi32, #tpu.memory_space<vmem>>, %arg3: memref<64x80xf32, #tpu.memory_space<vmem>>, %arg4: memref<1x64xf32, #tpu.memory_space<vmem>>, %arg5: memref<1xf32, #tpu.memory_space<smem>>, %arg6: memref<128x1xf32, #tpu.memory_space<vmem>>) attributes {dimension_semantics = [#tpu.dimension_semantics<parallel>], iteration_bounds = array<i64: 2>, scalar_prefetch = 0 : i64, scratch_operands = 0 : i64, tpu.core_type = #tpu.core_type<tc>, window_params = [{transform_indices = @transform_0, window_bounds = array<i64: 128, 1>}, {transform_indices = @transform_1, window_bounds = array<i64: 128, 1>}, {pipeline_mode = #tpu.pipeline_mode<synchronous>, transform_indices = @transform_2, window_bounds = array<i64: 64, 80>}, {pipeline_mode = #tpu.pipeline_mode<synchronous>, transform_indices = @transform_3, window_bounds = array<i64: 1, 64>}, {transform_indices = @transform_4, window_bounds = array<i64: 1>}, {transform_indices = @transform_5, window_bounds = array<i64: 128, 1>}]} {
    %c0 = arith.constant 0 : index
    %c0_0 = arith.constant 0 : index
    %0 = vector.load %arg3[%c0, %c0_0] : memref<64x80xf32, #tpu.memory_space<vmem>>, vector<64x80xf32>
    %1 = tpu.iota {dimensions = array<i32: 1>} : vector<128x64xi32>
    %c0_1 = arith.constant 0 : index
    %c0_2 = arith.constant 0 : index
    %2 = vector.load %arg1[%c0_1, %c0_2] : memref<128x1xi32, #tpu.memory_space<vmem>>, vector<128x1xi32>
    %3 = vector.broadcast %2 : vector<128x1xi32> to vector<128x64xi32>
    %4 = arith.cmpi eq, %3, %1 : vector<128x64xi32>
    %5 = arith.extui %4 : vector<128x64xi1> to vector<128x64xi32>
    %6 = arith.sitofp %5 : vector<128x64xi32> to vector<128x64xf32>
    %c0_3 = arith.constant 0 : index
    %c0_4 = arith.constant 0 : index
    %7 = vector.load %arg2[%c0_3, %c0_4] : memref<128x1xi32, #tpu.memory_space<vmem>>, vector<128x1xi32>
    %8 = vector.broadcast %7 : vector<128x1xi32> to vector<128x64xi32>
    %9 = arith.cmpi eq, %8, %1 : vector<128x64xi32>
    %10 = arith.extui %9 : vector<128x64xi1> to vector<128x64xi32>
    %11 = arith.sitofp %10 : vector<128x64xi32> to vector<128x64xf32>
    %cst = arith.constant dense<0.000000e+00> : vector<128x80xf32>
    %12 = tpu.matmul %6, %0, %cst {dimension_numbers = #tpu.dot_dimension_numbers<[1], [0], [0], [1], [0, 0, 1, 1], [], []>} : vector<128x64xf32>, vector<64x80xf32>, vector<128x80xf32> -> vector<128x80xf32>
    %cst_5 = arith.constant dense<0.000000e+00> : vector<128x80xf32>
    %13 = tpu.matmul %11, %0, %cst_5 {dimension_numbers = #tpu.dot_dimension_numbers<[1], [0], [0], [1], [0, 0, 1, 1], [], []>} : vector<128x64xf32>, vector<64x80xf32>, vector<128x80xf32> -> vector<128x80xf32>
    %c0_6 = arith.constant 0 : index
    %c0_7 = arith.constant 0 : index
    %14 = vector.load %arg4[%c0_6, %c0_7] : memref<1x64xf32, #tpu.memory_space<vmem>>, vector<1x64xf32>
    %15 = vector.broadcast %14 : vector<1x64xf32> to vector<128x64xf32>
    %16 = arith.mulf %6, %15 : vector<128x64xf32>
    %cst_8 = arith.constant dense<0.000000e+00> : vector<128xf32>
    %17 = vector.multi_reduction <add>, %16, %cst_8 [1] : vector<128x64xf32> to vector<128xf32>
    %18 = vector.shape_cast %17 : vector<128xf32> to vector<128x1xf32>
    %19 = vector.broadcast %14 : vector<1x64xf32> to vector<128x64xf32>
    %20 = arith.mulf %11, %19 : vector<128x64xf32>
    %cst_9 = arith.constant dense<0.000000e+00> : vector<128xf32>
    %21 = vector.multi_reduction <add>, %20, %cst_9 [1] : vector<128x64xf32> to vector<128xf32>
    %22 = vector.shape_cast %21 : vector<128xf32> to vector<128x1xf32>
    %23 = arith.mulf %12, %13 : vector<128x80xf32>
    %cst_10 = arith.constant dense<0.000000e+00> : vector<128xf32>
    %24 = vector.multi_reduction <add>, %23, %cst_10 [1] : vector<128x80xf32> to vector<128xf32>
    %25 = vector.shape_cast %24 : vector<128xf32> to vector<128x1xf32>
    %c0_11 = arith.constant 0 : index
    %26 = memref.load %arg5[%c0_11] : memref<1xf32, #tpu.memory_space<smem>>
    %27 = vector.broadcast %26 : f32 to vector<128x1xf32>
    %28 = arith.addf %27, %18 : vector<128x1xf32>
    %29 = arith.addf %28, %22 : vector<128x1xf32>
    %30 = arith.addf %29, %25 : vector<128x1xf32>
    %c0_12 = arith.constant 0 : index
    %c0_13 = arith.constant 0 : index
    %31 = vector.load %arg6[%c0_12, %c0_13] : memref<128x1xf32, #tpu.memory_space<vmem>>, vector<128x1xf32>
    tpu.vector_store %arg6[%c0_12, %c0_13], %30 {strides = array<i32>} : memref<128x1xf32, #tpu.memory_space<vmem>>, vector<128x1xf32>,
    return
  }
  func.func @transform_0(%arg0: i32) -> (i32, i32) {
    %c0_i32 = arith.constant 0 : i32
    %c0_i32_0 = arith.constant 0 : i32
    return %arg0, %c0_i32 : i32, i32
  }
  func.func @transform_1(%arg0: i32) -> (i32, i32) {
    %c0_i32 = arith.constant 0 : i32
    %c0_i32_0 = arith.constant 0 : i32
    return %arg0, %c0_i32 : i32, i32
  }
  func.func @transform_2(%arg0: i32) -> (i32, i32) {
    %c0_i32 = arith.constant 0 : i32
    %c0_i32_0 = arith.constant 0 : i32
    %c0_i32_1 = arith.constant 0 : i32
    return %c0_i32, %c0_i32_0 : i32, i32
  }
  func.func @transform_3(%arg0: i32) -> (i32, i32) {
    %c0_i32 = arith.constant 0 : i32
    %c0_i32_0 = arith.constant 0 : i32
    %c0_i32_1 = arith.constant 0 : i32
    return %c0_i32, %c0_i32_0 : i32, i32
  }
  func.func @transform_4(%arg0: i32) -> i32 {
    %c0_i32 = arith.constant 0 : i32
    %c0_i32_0 = arith.constant 0 : i32
    return %c0_i32 : i32
  }
  func.func @transform_5(%arg0: i32) -> (i32, i32) {
    %c0_i32 = arith.constant 0 : i32
    %c0_i32_0 = arith.constant 0 : i32
    return %arg0, %c0_i32 : i32, i32
  }
}

</mosaic_0001>

<llo_original>
// kernel: tpu_custom_call.1
$region0: #{tpu_custom_call.1}
  #allocation0 [shape = 'u32[]', space=smem, size = 0x4, offset = 0x4, fixed_abs, tag = 'smem constant byte address 0x4 - core index']
  #allocation1 [shape = 'u32[144,128]{1,0:T(1,128)}', space=vmem, size = 0x12000, scoped, tag = 'internal scratch']
  #allocation2 [shape = 'f32[1]{0:T(128)S(6)}', space=smem, size = 0x200, scoped, tag = 'scoped memory for tpu_custom_call.1']
  %s0 = inlined_call_operand.vmem [shape: s32[256,1], index: 0, kind: input, shape index: {}]
  %s1 = inlined_call_operand.vmem [shape: s32[256,1], index: 1, kind: input, shape index: {}]
  %s2 = inlined_call_operand.vmem [shape: f32[64,80], index: 2, kind: input, shape index: {}]
  %s3 = inlined_call_operand.vmem [shape: f32[1,64], index: 3, kind: input, shape index: {}]
  %s4 = inlined_call_operand.<no memory space> [shape: f32[1], index: 4, kind: input, shape index: {}]
  %s5 = inlined_call_operand.vmem [shape: f32[256,1], index: 5, kind: output, shape index: {}]
  %s6 = sld [smem:[#allocation0]]
  $region53: #{tpu_custom_call.1} parent=0
    _
  %s8 = ssub.s32 1, %s6
  %s9 = scalar_select 0, %s8, %s6
  %10 = sst [smem:[#allocation2]] %s4
  loop: start=0, step=1, limit=4
  $region2: #{tpu_custom_call.1} parent=0 // loop_pre_header
    _
  $region3: #{tpu_custom_call.1} parent=0 // loop_header
    %s12 = sphi 0, %s16
    %p13 = scmp.ge.s32.totalorder %s12, 4
    %s22 = sphi 0, %s24
    %s25 = sphi 0, %s22
    %s26 = sphi 0, %s25
    %s42 = sphi 0, %s26
    %s48 = sphi 0, %s50
    %s51 = sphi 0, %s48
    %s52 = sphi 0, %s51
    %s68 = sphi 0, %s52
    %s72 = sphi 0, %s72
    %s74 = sphi 0, %s72
    %s75 = sphi 0, %s74
    %s89 = sphi 0, %s75
    %s93 = sphi 0, %s93
    %s95 = sphi 0, %s93
    %s96 = sphi 0, %s95
    %s110 = sphi 0, %s96
    %s114 = sphi 0, %s114
    %s116 = sphi 0, %s114
    %s117 = sphi 0, %s116
    %s131 = sphi 0, %s117
    %s137 = sphi 0, %s139
    %s140 = sphi 0, %s137
    %s141 = sphi 0, %s140
    %s157 = sphi 0, %s141
  $region4: #{tpu_custom_call.1} parent=0 // loop_header_branch
    %15 = sbr.rel (%p13) target = $region8
  $region5: #{tpu_custom_call.1} parent=0 // loop_body
    %s17 = ssub.s32 %s12, 1
    %s18 = ssub.s32 %s12, 2
    %s19 = sadd.s32 %s12, 1
    %s20 = ssub.s32 %s12, %s19
    %p21 = scmp.eq.s32.totalorder %s20, 0
    %s23 = sadd.s32 %s22, 1
    %s24 = scalar_select %p21, %s22, %s23
    %p27 = pneg %p21
    %p28 = scmp.eq.s32.totalorder %s12, 1
    %p29 = por %p27, %p28
    %p30 = scmp.ne.s32.totalorder %s22, %s25
    %p31 = scmp.eq.s32.totalorder %s12, 0
    %p32 = por %p30, %p31
    %p33 = scmp.ne.s32.totalorder %s22, %s25
    %p34 = scmp.eq.s32.totalorder %s17, 1
    %p35 = por %p33, %p34
    %p36 = scmp.ne.s32.totalorder %s25, %s26
    %p37 = scmp.eq.s32.totalorder %s17, 0
    %p38 = por %p36, %p37
    %p39 = scmp.ne.s32.totalorder %s25, %s26
    %p40 = scmp.eq.s32.totalorder %s18, 1
    %p41 = por %p39, %p40
    %p43 = scmp.ne.s32.totalorder %s26, %s42
    %p44 = scmp.eq.s32.totalorder %s18, 0
    %p45 = por %p43, %p44
    %s46 = ssub.s32 %s12, %s19
    %p47 = scmp.eq.s32.totalorder %s46, 0
    %s49 = sadd.s32 %s48, 1
    %s50 = scalar_select %p47, %s48, %s49
    %p53 = pneg %p47
    %p54 = scmp.eq.s32.totalorder %s12, 1
    %p55 = por %p53, %p54
    %p56 = scmp.ne.s32.totalorder %s48, %s51
    %p57 = scmp.eq.s32.totalorder %s12, 0
    %p58 = por %p56, %p57
    %p59 = scmp.ne.s32.totalorder %s48, %s51
    %p60 = scmp.eq.s32.totalorder %s17, 1
    %p61 = por %p59, %p60
    %p62 = scmp.ne.s32.totalorder %s51, %s52
    %p63 = scmp.eq.s32.totalorder %s17, 0
    %p64 = por %p62, %p63
    %p65 = scmp.ne.s32.totalorder %s51, %s52
    %p66 = scmp.eq.s32.totalorder %s18, 1
    %p67 = por %p65, %p66
    %p69 = scmp.ne.s32.totalorder %s52, %s68
    %p70 = scmp.eq.s32.totalorder %s18, 0
    %p71 = por %p69, %p70
    %s73 = sadd.s32 %s72, 1
    %p76 = scmp.eq.s32.totalorder %s12, 1
    %p77 = scmp.ne.s32.totalorder %s72, %s74
    %p78 = scmp.eq.s32.totalorder %s12, 0
    %p79 = por %p77, %p78
    %p80 = scmp.ne.s32.totalorder %s72, %s74
    %p81 = scmp.eq.s32.totalorder %s17, 1
    %p82 = por %p80, %p81
    %p83 = scmp.ne.s32.totalorder %s74, %s75
    %p84 = scmp.eq.s32.totalorder %s17, 0
    %p85 = por %p83, %p84
    %p86 = scmp.ne.s32.totalorder %s74, %s75
    %p87 = scmp.eq.s32.totalorder %s18, 1
    %p88 = por %p86, %p87
    %p90 = scmp.ne.s32.totalorder %s75, %s89
    %p91 = scmp.eq.s32.totalorder %s18, 0
    %p92 = por %p90, %p91
    %s94 = sadd.s32 %s93, 1
    %p97 = scmp.eq.s32.totalorder %s12, 1
    %p98 = scmp.ne.s32.totalorder %s93, %s95
    %p99 = scmp.eq.s32.totalorder %s12, 0
    %p100 = por %p98, %p99
    %p101 = scmp.ne.s32.totalorder %s93, %s95
    %p102 = scmp.eq.s32.totalorder %s17, 1
    %p103 = por %p101, %p102
    %p104 = scmp.ne.s32.totalorder %s95, %s96
    %p105 = scmp.eq.s32.totalorder %s17, 0
    %p106 = por %p104, %p105
    %p107 = scmp.ne.s32.totalorder %s95, %s96
    %p108 = scmp.eq.s32.totalorder %s18, 1
    %p109 = por %p107, %p108
    %p111 = scmp.ne.s32.totalorder %s96, %s110
    %p112 = scmp.eq.s32.totalorder %s18, 0
    %p113 = por %p111, %p112
    %s115 = sadd.s32 %s114, 1
    %p118 = scmp.eq.s32.totalorder %s12, 1
    %p119 = scmp.ne.s32.totalorder %s114, %s116
    %p120 = scmp.eq.s32.totalorder %s12, 0
    %p121 = por %p119, %p120
    %p122 = scmp.ne.s32.totalorder %s114, %s116
    %p123 = scmp.eq.s32.totalorder %s17, 1
    %p124 = por %p122, %p123
    %p125 = scmp.ne.s32.totalorder %s116, %s117
    %p126 = scmp.eq.s32.totalorder %s17, 0
    %p127 = por %p125, %p126
    %p128 = scmp.ne.s32.totalorder %s116, %s117
    %p129 = scmp.eq.s32.totalorder %s18, 1
    %p130 = por %p128, %p129
    %p132 = scmp.ne.s32.totalorder %s117, %s131
    %p133 = scmp.eq.s32.totalorder %s18, 0
    %p134 = por %p132, %p133
    %s135 = ssub.s32 %s12, %s19
    %p136 = scmp.eq.s32.totalorder %s135, 0
    %s138 = sadd.s32 %s137, 1
    %s139 = scalar_select %p136, %s137, %s138
    %p142 = pneg %p136
    %p143 = scmp.eq.s32.totalorder %s12, 1
    %p144 = por %p142, %p143
    %p145 = scmp.ne.s32.totalorder %s137, %s140
    %p146 = scmp.eq.s32.totalorder %s12, 0
    %p147 = por %p145, %p146
    %p148 = scmp.ne.s32.totalorder %s137, %s140
    %p149 = scmp.eq.s32.totalorder %s17, 1
    %p150 = por %p148, %p149
    %p151 = scmp.ne.s32.totalorder %s140, %s141
    %p152 = scmp.eq.s32.totalorder %s17, 0
    %p153 = por %p151, %p152
    %p154 = scmp.ne.s32.totalorder %s140, %s141
    %p155 = scmp.eq.s32.totalorder %s18, 1
    %p156 = por %p154, %p155
    %p158 = scmp.ne.s32.totalorder %s141, %s157
    %p159 = scmp.eq.s32.totalorder %s18, 0
    %p160 = por %p158, %p159
    %p161 = scmp.le.s32.totalorder 1, %s12
    %p162 = scmp.lt.s32.totalorder %s12, 3
    %p163 = pnand %p161, %p162
    %p164 = pneg %p163
    // Predicated region
    $region9: #{tpu_custom_call.1} parent=5 // pred_check
      _
    $region10: #{tpu_custom_call.1} parent=5 // pred_check_branch
      %166 = sbr.rel (%p163) target = $region12
    $region11: #{tpu_custom_call.1} parent=5 // pred_region
      %s167 = ssub.s32 %s12, 1
      // Predicated region
      $region13: #{tpu_custom_call.1} parent=11 // pred_check
        %p168 = pneg %p85
      $region14: #{tpu_custom_call.1} parent=11 // pred_check_branch
        %170 = sbr.rel (%p168) target = $region16
      $region15: #{tpu_custom_call.1} parent=11 // pred_region
        _
      $region16: #{tpu_custom_call.1} parent=11 // pred_fallthru
        _
      // Predicated region
      $region17: #{tpu_custom_call.1} parent=11 // pred_check
        %p171 = pneg %p106
      $region18: #{tpu_custom_call.1} parent=11 // pred_check_branch
        %173 = sbr.rel (%p171) target = $region20
      $region19: #{tpu_custom_call.1} parent=11 // pred_region
        _
      $region20: #{tpu_custom_call.1} parent=11 // pred_fallthru
        _
      // Predicated region
      $region21: #{tpu_custom_call.1} parent=11 // pred_check
        %p174 = pneg %p127
      $region22: #{tpu_custom_call.1} parent=11 // pred_check_branch
        %176 = sbr.rel (%p174) target = $region24
      $region23: #{tpu_custom_call.1} parent=11 // pred_region
        _
      $region24: #{tpu_custom_call.1} parent=11 // pred_fallthru
        _
    $region12: #{tpu_custom_call.1} parent=5 // pred_fallthru
      _
    %p177 = scmp.lt.s32.totalorder %s12, 2
    // Predicated region
    $region25: #{tpu_custom_call.1} parent=5 // pred_check
      %p178 = pneg %p177
    $region26: #{tpu_custom_call.1} parent=5 // pred_check_branch
      %180 = sbr.rel (%p178) target = $region28
    $region27: #{tpu_custom_call.1} parent=5 // pred_region
      // Predicated region
      $region29: #{tpu_custom_call.1} parent=27 // pred_check
        %p181 = pneg %p32
      $region30: #{tpu_custom_call.1} parent=27 // pred_check_branch
        %183 = sbr.rel (%p181) target = $region32
      $region31: #{tpu_custom_call.1} parent=27 // pred_region
        %s184 = smul.u32 16, %s12
        %p185 = scmp.lt.s32.totalorder %s184, 31
        %s186 = scalar_select %p185, %s184, 31
        %s187 = smul.addr %s186, 8
        %s188 = scalar_lea.vmem %s0, %s187
        %s189 = smul.u32 16, %s12
      $region32: #{tpu_custom_call.1} parent=27 // pred_fallthru
        _
      // Predicated region
      $region33: #{tpu_custom_call.1} parent=27 // pred_check
        %p190 = pneg %p58
      $region34: #{tpu_custom_call.1} parent=27 // pred_check_branch
        %192 = sbr.rel (%p190) target = $region36
      $region35: #{tpu_custom_call.1} parent=27 // pred_region
        %s193 = smul.u32 16, %s12
        %p194 = scmp.lt.s32.totalorder %s193, 31
        %s195 = scalar_select %p194, %s193, 31
        %s196 = smul.addr %s195, 8
        %s197 = scalar_lea.vmem %s1, %s196
        %s198 = smul.u32 16, %s12
      $region36: #{tpu_custom_call.1} parent=27 // pred_fallthru
        _
    $region28: #{tpu_custom_call.1} parent=5 // pred_fallthru
      _
    %p199 = scmp.le.s32.totalorder 1, %s12
    %p200 = scmp.lt.s32.totalorder %s12, 3
    %p201 = pnand %p199, %p200
    %p202 = pneg %p201
    // Predicated region
    $region37: #{tpu_custom_call.1} parent=5 // pred_check
      _
    $region38: #{tpu_custom_call.1} parent=5 // pred_check_branch
      %204 = sbr.rel (%p201) target = $region40
    $region39: #{tpu_custom_call.1} parent=5 // pred_region
      %s205 = ssub.s32 %s12, 1
      %s206 = smul.u32 16, %s17
      %p207 = scmp.lt.s32.totalorder %s206, 31
      %s208 = scalar_select %p207, %s206, 31
      %s209 = smul.addr %s208, 8
      %s210 = scalar_lea.vmem %s0, %s209
      %p211 = pneg %p38
      %p212 = pneg %p35
      %s213 = smul.u32 16, %s17
      %p214 = scmp.lt.s32.totalorder %s213, 31
      %s215 = scalar_select %p214, %s213, 31
      %s216 = smul.addr %s215, 8
      %s217 = scalar_lea.vmem %s1, %s216
      %p218 = pneg %p64
      %p219 = pneg %p61
      %p220 = pneg %p85
      %p221 = pneg %p82
      %p222 = pneg %p106
      %p223 = pneg %p103
      %p224 = pneg %p127
      %p225 = pneg %p124
      %p226 = pneg %p153
      %p227 = pneg %p150
      %s228 = smul.u32 16, %s17
      %p229 = scmp.lt.s32.totalorder %s228, 31
      %s230 = scalar_select %p229, %s228, 31
      %s231 = smul.addr %s230, 8
      %s232 = scalar_lea.vmem %s5, %s231
      %s233 = smul.u32 16, %s17
      %p234 = scmp.lt.s32.totalorder %s233, 31
      %s235 = scalar_select %p234, %s233, 31
      %s236 = smul.addr %s235, 8
      %s237 = scalar_lea.vmem %s0, %s236
      %s238 = smul.u32 16, %s17
      %s239 = smul.u32 16, %s17
      %p240 = scmp.lt.s32.totalorder %s239, 31
      %s241 = scalar_select %p240, %s239, 31
      %s242 = smul.addr %s241, 8
      %s243 = scalar_lea.vmem %s1, %s242
      %s244 = smul.u32 16, %s17
      %s245 = smul.u32 16, %s17
      %p246 = scmp.lt.s32.totalorder %s245, 31
      %s247 = scalar_select %p246, %s245, 31
      %s248 = smul.addr %s247, 8
      %s249 = scalar_lea.vmem %s5, %s248
      %s250 = smul.u32 16, %s17
      %v251 = vld [vmem:[%s2] sm:$0xff]
      %v252 = vld [vmem:[%s2 + $0x8] sm:$0xff]
      %v253 = vld [vmem:[%s2 + $0x10] sm:$0xff]
      %v254 = vld [vmem:[%s2 + $0x18] sm:$0xff]
      %v255 = vld [vmem:[%s2 + $0x20] sm:$0xff]
      %v256 = vld [vmem:[%s2 + $0x28] sm:$0xff]
      %v257 = vld [vmem:[%s2 + $0x30] sm:$0xff]
      %v258 = vld [vmem:[%s2 + $0x38] sm:$0xff]
      %v259 = vlaneseq
      %v260 = vand.u32 %v259, 127
      %v261 = vld [vmem:[%s237] sm:$0xff]
      %v262 = vld [vmem:[%s237 + $0x8] sm:$0xff]
      %v263 = vld [vmem:[%s237 + $0x10] sm:$0xff]
      %v264 = vld [vmem:[%s237 + $0x18] sm:$0xff]
      %v265 = vld [vmem:[%s237 + $0x20] sm:$0xff]
      %v266 = vld [vmem:[%s237 + $0x28] sm:$0xff]
      %v267 = vld [vmem:[%s237 + $0x30] sm:$0xff]
      %v268 = vld [vmem:[%s237 + $0x38] sm:$0xff]
      %v269 = vld [vmem:[%s237 + $0x40] sm:$0xff]
      %v270 = vld [vmem:[%s237 + $0x48] sm:$0xff]
      %v271 = vld [vmem:[%s237 + $0x50] sm:$0xff]
      %v272 = vld [vmem:[%s237 + $0x58] sm:$0xff]
      %v273 = vld [vmem:[%s237 + $0x60] sm:$0xff]
      %v274 = vld [vmem:[%s237 + $0x68] sm:$0xff]
      %v275 = vld [vmem:[%s237 + $0x70] sm:$0xff]
      %v276 = vld [vmem:[%s237 + $0x78] sm:$0xff]
      %277 = vset.pattern.permute.xlu0 0
      %278 = vperm.xlu0 %277, %v261
      %v279 = vpop.permute.xlu0 %278
      %280 = vset.pattern.permute.xlu0 0
      %281 = vperm.xlu0 %280, %v262
      %v282 = vpop.permute.xlu0 %281
      %283 = vset.pattern.permute.xlu0 0
      %284 = vperm.xlu0 %283, %v263
      %v285 = vpop.permute.xlu0 %284
      %286 = vset.pattern.permute.xlu0 0
      %287 = vperm.xlu0 %286, %v264
      %v288 = vpop.permute.xlu0 %287
      %289 = vset.pattern.permute.xlu0 0
      %290 = vperm.xlu0 %289, %v265
      %v291 = vpop.permute.xlu0 %290
      %292 = vset.pattern.permute.xlu0 0
      %293 = vperm.xlu0 %292, %v266
      %v294 = vpop.permute.xlu0 %293
      %295 = vset.pattern.permute.xlu0 0
      %296 = vperm.xlu0 %295, %v267
      %v297 = vpop.permute.xlu0 %296
      %298 = vset.pattern.permute.xlu0 0
      %299 = vperm.xlu0 %298, %v268
      %v300 = vpop.permute.xlu0 %299
      %301 = vset.pattern.permute.xlu0 0
      %302 = vperm.xlu0 %301, %v269
      %v303 = vpop.permute.xlu0 %302
      %304 = vset.pattern.permute.xlu0 0
      %305 = vperm.xlu0 %304, %v270
      %v306 = vpop.permute.xlu0 %305
      %307 = vset.pattern.permute.xlu0 0
      %308 = vperm.xlu0 %307, %v271
      %v309 = vpop.permute.xlu0 %308
      %310 = vset.pattern.permute.xlu0 0
      %311 = vperm.xlu0 %310, %v272
      %v312 = vpop.permute.xlu0 %311
      %313 = vset.pattern.permute.xlu0 0
      %314 = vperm.xlu0 %313, %v273
      %v315 = vpop.permute.xlu0 %314
      %316 = vset.pattern.permute.xlu0 0
      %317 = vperm.xlu0 %316, %v274
      %v318 = vpop.permute.xlu0 %317
      %319 = vset.pattern.permute.xlu0 0
      %320 = vperm.xlu0 %319, %v275
      %v321 = vpop.permute.xlu0 %320
      %322 = vset.pattern.permute.xlu0 0
      %323 = vperm.xlu0 %322, %v276
      %v324 = vpop.permute.xlu0 %323
      %vm325 = vcmp.eq.s32.totalorder %v279, %v260
      %vm326 = vcmp.eq.s32.totalorder %v282, %v260
      %vm327 = vcmp.eq.s32.totalorder %v285, %v260
      %vm328 = vcmp.eq.s32.totalorder %v288, %v260
      %vm329 = vcmp.eq.s32.totalorder %v291, %v260
      %vm330 = vcmp.eq.s32.totalorder %v294, %v260
      %vm331 = vcmp.eq.s32.totalorder %v297, %v260
      %vm332 = vcmp.eq.s32.totalorder %v300, %v260
      %vm333 = vcmp.eq.s32.totalorder %v303, %v260
      %vm334 = vcmp.eq.s32.totalorder %v306, %v260
      %vm335 = vcmp.eq.s32.totalorder %v309, %v260
      %vm336 = vcmp.eq.s32.totalorder %v312, %v260
      %vm337 = vcmp.eq.s32.totalorder %v315, %v260
      %vm338 = vcmp.eq.s32.totalorder %v318, %v260
      %vm339 = vcmp.eq.s32.totalorder %v321, %v260
      %vm340 = vcmp.eq.s32.totalorder %v324, %v260
      %v341 = vsel %vm325, 1, 0
      %v342 = vsel %vm326, 1, 0
      %v343 = vsel %vm327, 1, 0
      %v344 = vsel %vm328, 1, 0
      %v345 = vsel %vm329, 1, 0
      %v346 = vsel %vm330, 1, 0
      %v347 = vsel %vm331, 1, 0
      %v348 = vsel %vm332, 1, 0
      %v349 = vsel %vm333, 1, 0
      %v350 = vsel %vm334, 1, 0
      %v351 = vsel %vm335, 1, 0
      %v352 = vsel %vm336, 1, 0
      %v353 = vsel %vm337, 1, 0
      %v354 = vsel %vm338, 1, 0
      %v355 = vsel %vm339, 1, 0
      %v356 = vsel %vm340, 1, 0
      %v357 = vcvt.s32.f32 %v341
      %v358 = vcvt.s32.f32 %v342
      %v359 = vcvt.s32.f32 %v343
      %v360 = vcvt.s32.f32 %v344
      %v361 = vcvt.s32.f32 %v345
      %v362 = vcvt.s32.f32 %v346
      %v363 = vcvt.s32.f32 %v347
      %v364 = vcvt.s32.f32 %v348
      %v365 = vcvt.s32.f32 %v349
      %v366 = vcvt.s32.f32 %v350
      %v367 = vcvt.s32.f32 %v351
      %v368 = vcvt.s32.f32 %v352
      %v369 = vcvt.s32.f32 %v353
      %v370 = vcvt.s32.f32 %v354
      %v371 = vcvt.s32.f32 %v355
      %v372 = vcvt.s32.f32 %v356
      %v373 = vld [vmem:[%s243] sm:$0xff]
      %v374 = vld [vmem:[%s243 + $0x8] sm:$0xff]
      %v375 = vld [vmem:[%s243 + $0x10] sm:$0xff]
      %v376 = vld [vmem:[%s243 + $0x18] sm:$0xff]
      %v377 = vld [vmem:[%s243 + $0x20] sm:$0xff]
      %v378 = vld [vmem:[%s243 + $0x28] sm:$0xff]
      %v379 = vld [vmem:[%s243 + $0x30] sm:$0xff]
      %v380 = vld [vmem:[%s243 + $0x38] sm:$0xff]
      %v381 = vld [vmem:[%s243 + $0x40] sm:$0xff]
      %v382 = vld [vmem:[%s243 + $0x48] sm:$0xff]
      %v383 = vld [vmem:[%s243 + $0x50] sm:$0xff]
      %v384 = vld [vmem:[%s243 + $0x58] sm:$0xff]
      %v385 = vld [vmem:[%s243 + $0x60] sm:$0xff]
      %v386 = vld [vmem:[%s243 + $0x68] sm:$0xff]
      %v387 = vld [vmem:[%s243 + $0x70] sm:$0xff]
      %v388 = vld [vmem:[%s243 + $0x78] sm:$0xff]
      %389 = vset.pattern.permute.xlu0 0
      %390 = vperm.xlu0 %389, %v373
      %v391 = vpop.permute.xlu0 %390
      %392 = vset.pattern.permute.xlu0 0
      %393 = vperm.xlu0 %392, %v374
      %v394 = vpop.permute.xlu0 %393
      %395 = vset.pattern.permute.xlu0 0
      %396 = vperm.xlu0 %395, %v375
      %v397 = vpop.permute.xlu0 %396
      %398 = vset.pattern.permute.xlu0 0
      %399 = vperm.xlu0 %398, %v376
      %v400 = vpop.permute.xlu0 %399
      %401 = vset.pattern.permute.xlu0 0
      %402 = vperm.xlu0 %401, %v377
      %v403 = vpop.permute.xlu0 %402
      %404 = vset.pattern.permute.xlu0 0
      %405 = vperm.xlu0 %404, %v378
      %v406 = vpop.permute.xlu0 %405
      %407 = vset.pattern.permute.xlu0 0
      %408 = vperm.xlu0 %407, %v379
      %v409 = vpop.permute.xlu0 %408
      %410 = vset.pattern.permute.xlu0 0
      %411 = vperm.xlu0 %410, %v380
      %v412 = vpop.permute.xlu0 %411
      %413 = vset.pattern.permute.xlu0 0
      %414 = vperm.xlu0 %413, %v381
      %v415 = vpop.permute.xlu0 %414
      %416 = vset.pattern.permute.xlu0 0
      %417 = vperm.xlu0 %416, %v382
      %v418 = vpop.permute.xlu0 %417
      %419 = vset.pattern.permute.xlu0 0
      %420 = vperm.xlu0 %419, %v383
      %v421 = vpop.permute.xlu0 %420
      %422 = vset.pattern.permute.xlu0 0
      %423 = vperm.xlu0 %422, %v384
      %v424 = vpop.permute.xlu0 %423
      %425 = vset.pattern.permute.xlu0 0
      %426 = vperm.xlu0 %425, %v385
      %v427 = vpop.permute.xlu0 %426
      %428 = vset.pattern.permute.xlu0 0
      %429 = vperm.xlu0 %428, %v386
      %v430 = vpop.permute.xlu0 %429
      %431 = vset.pattern.permute.xlu0 0
      %432 = vperm.xlu0 %431, %v387
      %v433 = vpop.permute.xlu0 %432
      %434 = vset.pattern.permute.xlu0 0
      %435 = vperm.xlu0 %434, %v388
      %v436 = vpop.permute.xlu0 %435
      %vm437 = vcmp.eq.s32.totalorder %v391, %v260
      %vm438 = vcmp.eq.s32.totalorder %v394, %v260
      %vm439 = vcmp.eq.s32.totalorder %v397, %v260
      %vm440 = vcmp.eq.s32.totalorder %v400, %v260
      %vm441 = vcmp.eq.s32.totalorder %v403, %v260
      %vm442 = vcmp.eq.s32.totalorder %v406, %v260
      %vm443 = vcmp.eq.s32.totalorder %v409, %v260
      %vm444 = vcmp.eq.s32.totalorder %v412, %v260
      %vm445 = vcmp.eq.s32.totalorder %v415, %v260
      %vm446 = vcmp.eq.s32.totalorder %v418, %v260
      %vm447 = vcmp.eq.s32.totalorder %v421, %v260
      %vm448 = vcmp.eq.s32.totalorder %v424, %v260
      %vm449 = vcmp.eq.s32.totalorder %v427, %v260
      %vm450 = vcmp.eq.s32.totalorder %v430, %v260
      %vm451 = vcmp.eq.s32.totalorder %v433, %v260
      %vm452 = vcmp.eq.s32.totalorder %v436, %v260
      %v453 = vsel %vm437, 1, 0
      %v454 = vsel %vm438, 1, 0
      %v455 = vsel %vm439, 1, 0
      %v456 = vsel %vm440, 1, 0
      %v457 = vsel %vm441, 1, 0
      %v458 = vsel %vm442, 1, 0
      %v459 = vsel %vm443, 1, 0
      %v460 = vsel %vm444, 1, 0
      %v461 = vsel %vm445, 1, 0
      %v462 = vsel %vm446, 1, 0
      %v463 = vsel %vm447, 1, 0
      %v464 = vsel %vm448, 1, 0
      %v465 = vsel %vm449, 1, 0
      %v466 = vsel %vm450, 1, 0
      %v467 = vsel %vm451, 1, 0
      %v468 = vsel %vm452, 1, 0
      %v469 = vcvt.s32.f32 %v453
      %v470 = vcvt.s32.f32 %v454
      %v471 = vcvt.s32.f32 %v455
      %v472 = vcvt.s32.f32 %v456
      %v473 = vcvt.s32.f32 %v457
      %v474 = vcvt.s32.f32 %v458
      %v475 = vcvt.s32.f32 %v459
      %v476 = vcvt.s32.f32 %v460
      %v477 = vcvt.s32.f32 %v461
      %v478 = vcvt.s32.f32 %v462
      %v479 = vcvt.s32.f32 %v463
      %v480 = vcvt.s32.f32 %v464
      %v481 = vcvt.s32.f32 %v465
      %v482 = vcvt.s32.f32 %v466
      %v483 = vcvt.s32.f32 %v467
      %v484 = vcvt.s32.f32 %v468
      %vm485 = vcmask 523264
      %v487 = vsel %vm485, %v357, 0
      %v490 = vsel %vm485, %v358, 0
      %v493 = vsel %vm485, %v359, 0
      %v496 = vsel %vm485, %v360, 0
      %v499 = vsel %vm485, %v361, 0
      %v502 = vsel %vm485, %v362, 0
      %v505 = vsel %vm485, %v363, 0
      %v508 = vsel %vm485, %v364, 0
      %v511 = vsel %vm485, %v365, 0
      %v514 = vsel %vm485, %v366, 0
      %v517 = vsel %vm485, %v367, 0
      %v520 = vsel %vm485, %v368, 0
      %v523 = vsel %vm485, %v369, 0
      %v526 = vsel %vm485, %v370, 0
      %v529 = vsel %vm485, %v371, 0
      %v532 = vsel %vm485, %v372, 0
      %534 = vmatprep.subr.mxu0 0.0
      %535 = vmatpush1.msra.mxu0 %v251
      %536 = vmatprep.subr.mxu0 0.0
      %537 = vmatpush1.msra.mxu0 %v252
      %538 = vmatprep.subr.mxu0 0.0
      %539 = vmatpush1.msra.mxu0 %v253
      %540 = vmatprep.subr.mxu0 0.0
      %541 = vmatpush1.msra.mxu0 %v254
      %542 = vmatprep.subr.mxu0 0.0
      %543 = vmatpush1.msra.mxu0 %v255
      %544 = vmatprep.subr.mxu0 0.0
      %545 = vmatpush1.msra.mxu0 %v256
      %546 = vmatprep.subr.mxu0 0.0
      %547 = vmatpush1.msra.mxu0 %v257
      %548 = vmatprep.subr.mxu0 0.0
      %549 = vmatpush1.msra.mxu0 %v258
      %550 = vmatprep.subr.mxu0 0.0
      %551 = vmatpush1.msra.mxu0 0.0
      %552 = vmatprep.subr.mxu0 0.0
      %553 = vmatpush1.msra.mxu0 0.0
      %554 = vmatprep.subr.mxu0 0.0
      %555 = vmatpush1.msra.mxu0 0.0
      %556 = vmatprep.subr.mxu0 0.0
      %557 = vmatpush1.msra.mxu0 0.0
      %558 = vmatprep.subr.mxu0 0.0
      %559 = vmatpush1.msra.mxu0 0.0
      %560 = vmatprep.subr.mxu0 0.0
      %561 = vmatpush1.msra.mxu0 0.0
      %562 = vmatprep.subr.mxu0 0.0
      %563 = vmatpush1.msra.mxu0 0.0
      %564 = vmatprep.subr.mxu0 0.0
      %565 = vmatpush1.msra.mxu0 0.0
      %566 = vmatprep.subr.mxu0 0.0
      %567 = vmatpush1.msra.mxu0 0.0
      %568 = vmatprep.subr.mxu0 0.0
      %569 = vmatpush1.msra.mxu0 0.0
      %570 = vmatprep.subr.mxu0 0.0
      %571 = vmatpush1.msra.mxu0 0.0
      %572 = vmatprep.subr.mxu0 0.0
      %573 = vmatpush1.msra.mxu0 0.0
      %574 = vmatprep.subr.mxu0 0.0
      %575 = vmatpush1.msra.mxu0 0.0
      %576 = vmatprep.subr.mxu0 0.0
      %577 = vmatpush1.msra.mxu0 0.0
      %578 = vmatprep.subr.mxu0 0.0
      %579 = vmatpush1.msra.mxu0 0.0
      %580 = vmatprep.subr.mxu0 0.0
      %581 = vmatpush1.msra.mxu0 0.0
      %582 = vmatprep.subr.mxu0 0.0
      %583 = vmatpush1.msra.mxu0 0.0
      %584 = vmatprep.subr.mxu0 0.0
      %585 = vmatpush1.msra.mxu0 0.0
      %586 = vmatprep.subr.mxu0 0.0
      %587 = vmatpush1.msra.mxu0 0.0
      %588 = vmatprep.subr.mxu0 0.0
      %589 = vmatpush1.msra.mxu0 0.0
      %590 = vmatprep.subr.mxu0 0.0
      %591 = vmatpush1.msra.mxu0 0.0
      %592 = vmatprep.subr.mxu0 0.0
      %593 = vmatpush1.msra.mxu0 0.0
      %594 = vmatprep.subr.mxu0 0.0
      %595 = vmatpush1.msra.mxu0 0.0
      %596 = vmatprep.subr.mxu0 0.0
      %597 = vmatpush1.msra.mxu0 0.0
      %598 = vmatprep.mubr.f32.mxu0 0.0
      %599 = vmatmul.mubr.f32.gmra.mrb[0].mxu0 %v487
      %v600 = vpop.f32.mrb[0].mxu0
      %v601 = vadd.f32 0.0, %v600
      %v602 = vpop.f32.mrb[0].mxu0
      %603 = vmatprep.mubr.f32.mxu0 0.0
      %604 = vmatmul.mubr.f32.gmra.mrb[0].mxu0 %v490
      %v605 = vpop.f32.mrb[0].mxu0
      %v606 = vadd.f32 0.0, %v605
      %v607 = vpop.f32.mrb[0].mxu0
      %608 = vmatprep.mubr.f32.mxu0 0.0
      %609 = vmatmul.mubr.f32.gmra.mrb[0].mxu0 %v493
      %v610 = vpop.f32.mrb[0].mxu0
      %v611 = vadd.f32 0.0, %v610
      %v612 = vpop.f32.mrb[0].mxu0
      %613 = vmatprep.mubr.f32.mxu0 0.0
      %614 = vmatmul.mubr.f32.gmra.mrb[0].mxu0 %v496
      %v615 = vpop.f32.mrb[0].mxu0
      %v616 = vadd.f32 0.0, %v615
      %v617 = vpop.f32.mrb[0].mxu0
      %618 = vmatprep.mubr.f32.mxu0 0.0
      %619 = vmatmul.mubr.f32.gmra.mrb[0].mxu0 %v499
      %v620 = vpop.f32.mrb[0].mxu0
      %v621 = vadd.f32 0.0, %v620
      %v622 = vpop.f32.mrb[0].mxu0
      %623 = vmatprep.mubr.f32.mxu0 0.0
      %624 = vmatmul.mubr.f32.gmra.mrb[0].mxu0 %v502
      %v625 = vpop.f32.mrb[0].mxu0
      %v626 = vadd.f32 0.0, %v625
      %v627 = vpop.f32.mrb[0].mxu0
      %628 = vmatprep.mubr.f32.mxu0 0.0
      %629 = vmatmul.mubr.f32.gmra.mrb[0].mxu0 %v505
      %v630 = vpop.f32.mrb[0].mxu0
      %v631 = vadd.f32 0.0, %v630
      %v632 = vpop.f32.mrb[0].mxu0
      %633 = vmatprep.mubr.f32.mxu0 0.0
      %634 = vmatmul.mubr.f32.gmra.mrb[0].mxu0 %v508
      %v635 = vpop.f32.mrb[0].mxu0
      %v636 = vadd.f32 0.0, %v635
      %v637 = vpop.f32.mrb[0].mxu0
      %638 = vmatprep.mubr.f32.mxu0 0.0
      %639 = vmatmul.mubr.f32.gmra.mrb[0].mxu0 %v511
      %v640 = vpop.f32.mrb[0].mxu0
      %v641 = vadd.f32 0.0, %v640
      %v642 = vpop.f32.mrb[0].mxu0
      %643 = vmatprep.mubr.f32.mxu0 0.0
      %644 = vmatmul.mubr.f32.gmra.mrb[0].mxu0 %v514
      %v645 = vpop.f32.mrb[0].mxu0
      %v646 = vadd.f32 0.0, %v645
      %v647 = vpop.f32.mrb[0].mxu0
      %648 = vmatprep.mubr.f32.mxu0 0.0
      %649 = vmatmul.mubr.f32.gmra.mrb[0].mxu0 %v517
      %v650 = vpop.f32.mrb[0].mxu0
      %v651 = vadd.f32 0.0, %v650
      %v652 = vpop.f32.mrb[0].mxu0
      %653 = vmatprep.mubr.f32.mxu0 0.0
      %654 = vmatmul.mubr.f32.gmra.mrb[0].mxu0 %v520
      %v655 = vpop.f32.mrb[0].mxu0
      %v656 = vadd.f32 0.0, %v655
      %v657 = vpop.f32.mrb[0].mxu0
      %658 = vmatprep.mubr.f32.mxu0 0.0
      %659 = vmatmul.mubr.f32.gmra.mrb[0].mxu0 %v523
      %v660 = vpop.f32.mrb[0].mxu0
      %v661 = vadd.f32 0.0, %v660
      %v662 = vpop.f32.mrb[0].mxu0
      %663 = vmatprep.mubr.f32.mxu0 0.0
      %664 = vmatmul.mubr.f32.gmra.mrb[0].mxu0 %v526
      %v665 = vpop.f32.mrb[0].mxu0
      %v666 = vadd.f32 0.0, %v665
      %v667 = vpop.f32.mrb[0].mxu0
      %668 = vmatprep.mubr.f32.mxu0 0.0
      %669 = vmatmul.mubr.f32.gmra.mrb[0].mxu0 %v529
      %v670 = vpop.f32.mrb[0].mxu0
      %v671 = vadd.f32 0.0, %v670
      %v672 = vpop.f32.mrb[0].mxu0
      %673 = vmatprep.mubr.f32.mxu0 0.0
      %674 = vmatmul.mubr.f32.gmra.mrb[0].mxu0 %v532
      %v675 = vpop.f32.mrb[0].mxu0
      %v676 = vadd.f32 0.0, %v675
      %v677 = vpop.f32.mrb[0].mxu0
      %678 = vdwg.mxu0
      %v680 = vsel %vm485, %v469, 0
      %v683 = vsel %vm485, %v470, 0
      %v686 = vsel %vm485, %v471, 0
      %v689 = vsel %vm485, %v472, 0
      %v692 = vsel %vm485, %v473, 0
      %v695 = vsel %vm485, %v474, 0
      %v698 = vsel %vm485, %v475, 0
      %v701 = vsel %vm485, %v476, 0
      %v704 = vsel %vm485, %v477, 0
      %v707 = vsel %vm485, %v478, 0
      %v710 = vsel %vm485, %v479, 0
      %v713 = vsel %vm485, %v480, 0
      %v716 = vsel %vm485, %v481, 0
      %v719 = vsel %vm485, %v482, 0
      %v722 = vsel %vm485, %v483, 0
      %v725 = vsel %vm485, %v484, 0
      %727 = vmatprep.subr.mxu0 0.0
      %728 = vmatpush1.msra.mxu0 %v251
      %729 = vmatprep.subr.mxu0 0.0
      %730 = vmatpush1.msra.mxu0 %v252
      %731 = vmatprep.subr.mxu0 0.0
      %732 = vmatpush1.msra.mxu0 %v253
      %733 = vmatprep.subr.mxu0 0.0
      %734 = vmatpush1.msra.mxu0 %v254
      %735 = vmatprep.subr.mxu0 0.0
      %736 = vmatpush1.msra.mxu0 %v255
      %737 = vmatprep.subr.mxu0 0.0
      %738 = vmatpush1.msra.mxu0 %v256
      %739 = vmatprep.subr.mxu0 0.0
      %740 = vmatpush1.msra.mxu0 %v257
      %741 = vmatprep.subr.mxu0 0.0
      %742 = vmatpush1.msra.mxu0 %v258
      %743 = vmatprep.subr.mxu0 0.0
      %744 = vmatpush1.msra.mxu0 0.0
      %745 = vmatprep.subr.mxu0 0.0
      %746 = vmatpush1.msra.mxu0 0.0
      %747 = vmatprep.subr.mxu0 0.0
      %748 = vmatpush1.msra.mxu0 0.0
      %749 = vmatprep.subr.mxu0 0.0
      %750 = vmatpush1.msra.mxu0 0.0
      %751 = vmatprep.subr.mxu0 0.0
      %752 = vmatpush1.msra.mxu0 0.0
      %753 = vmatprep.subr.mxu0 0.0
      %754 = vmatpush1.msra.mxu0 0.0
      %755 = vmatprep.subr.mxu0 0.0
      %756 = vmatpush1.msra.mxu0 0.0
      %757 = vmatprep.subr.mxu0 0.0
      %758 = vmatpush1.msra.mxu0 0.0
      %759 = vmatprep.subr.mxu0 0.0
      %760 = vmatpush1.msra.mxu0 0.0
      %761 = vmatprep.subr.mxu0 0.0
      %762 = vmatpush1.msra.mxu0 0.0
      %763 = vmatprep.subr.mxu0 0.0
      %764 = vmatpush1.msra.mxu0 0.0
      %765 = vmatprep.subr.mxu0 0.0
      %766 = vmatpush1.msra.mxu0 0.0
      %767 = vmatprep.subr.mxu0 0.0
      %768 = vmatpush1.msra.mxu0 0.0
      %769 = vmatprep.subr.mxu0 0.0
      %770 = vmatpush1.msra.mxu0 0.0
      %771 = vmatprep.subr.mxu0 0.0
      %772 = vmatpush1.msra.mxu0 0.0
      %773 = vmatprep.subr.mxu0 0.0
      %774 = vmatpush1.msra.mxu0 0.0
      %775 = vmatprep.subr.mxu0 0.0
      %776 = vmatpush1.msra.mxu0 0.0
      %777 = vmatprep.subr.mxu0 0.0
      %778 = vmatpush1.msra.mxu0 0.0
      %779 = vmatprep.subr.mxu0 0.0
      %780 = vmatpush1.msra.mxu0 0.0
      %781 = vmatprep.subr.mxu0 0.0
      %782 = vmatpush1.msra.mxu0 0.0
      %783 = vmatprep.subr.mxu0 0.0
      %784 = vmatpush1.msra.mxu0 0.0
      %785 = vmatprep.subr.mxu0 0.0
      %786 = vmatpush1.msra.mxu0 0.0
      %787 = vmatprep.subr.mxu0 0.0
      %788 = vmatpush1.msra.mxu0 0.0
      %789 = vmatprep.subr.mxu0 0.0
      %790 = vmatpush1.msra.mxu0 0.0
      %791 = vmatprep.mubr.f32.mxu0 0.0
      %792 = vmatmul.mubr.f32.gmra.mrb[0].mxu0 %v680
      %v793 = vpop.f32.mrb[0].mxu0
      %v794 = vadd.f32 0.0, %v793
      %v795 = vpop.f32.mrb[0].mxu0
      %796 = vmatprep.mubr.f32.mxu0 0.0
      %797 = vmatmul.mubr.f32.gmra.mrb[0].mxu0 %v683
      %v798 = vpop.f32.mrb[0].mxu0
      %v799 = vadd.f32 0.0, %v798
      %v800 = vpop.f32.mrb[0].mxu0
      %801 = vmatprep.mubr.f32.mxu0 0.0
      %802 = vmatmul.mubr.f32.gmra.mrb[0].mxu0 %v686
      %v803 = vpop.f32.mrb[0].mxu0
      %v804 = vadd.f32 0.0, %v803
      %v805 = vpop.f32.mrb[0].mxu0
      %806 = vmatprep.mubr.f32.mxu0 0.0
      %807 = vmatmul.mubr.f32.gmra.mrb[0].mxu0 %v689
      %v808 = vpop.f32.mrb[0].mxu0
      %v809 = vadd.f32 0.0, %v808
      %v810 = vpop.f32.mrb[0].mxu0
      %811 = vmatprep.mubr.f32.mxu0 0.0
      %812 = vmatmul.mubr.f32.gmra.mrb[0].mxu0 %v692
      %v813 = vpop.f32.mrb[0].mxu0
      %v814 = vadd.f32 0.0, %v813
      %v815 = vpop.f32.mrb[0].mxu0
      %816 = vmatprep.mubr.f32.mxu0 0.0
      %817 = vmatmul.mubr.f32.gmra.mrb[0].mxu0 %v695
      %v818 = vpop.f32.mrb[0].mxu0
      %v819 = vadd.f32 0.0, %v818
      %v820 = vpop.f32.mrb[0].mxu0
      %821 = vmatprep.mubr.f32.mxu0 0.0
      %822 = vmatmul.mubr.f32.gmra.mrb[0].mxu0 %v698
      %v823 = vpop.f32.mrb[0].mxu0
      %v824 = vadd.f32 0.0, %v823
      %v825 = vpop.f32.mrb[0].mxu0
      %826 = vmatprep.mubr.f32.mxu0 0.0
      %827 = vmatmul.mubr.f32.gmra.mrb[0].mxu0 %v701
      %v828 = vpop.f32.mrb[0].mxu0
      %v829 = vadd.f32 0.0, %v828
      %v830 = vpop.f32.mrb[0].mxu0
      %831 = vmatprep.mubr.f32.mxu0 0.0
      %832 = vmatmul.mubr.f32.gmra.mrb[0].mxu0 %v704
      %v833 = vpop.f32.mrb[0].mxu0
      %v834 = vadd.f32 0.0, %v833
      %v835 = vpop.f32.mrb[0].mxu0
      %836 = vmatprep.mubr.f32.mxu0 0.0
      %837 = vmatmul.mubr.f32.gmra.mrb[0].mxu0 %v707
      %v838 = vpop.f32.mrb[0].mxu0
      %v839 = vadd.f32 0.0, %v838
      %v840 = vpop.f32.mrb[0].mxu0
      %841 = vmatprep.mubr.f32.mxu0 0.0
      %842 = vmatmul.mubr.f32.gmra.mrb[0].mxu0 %v710
      %v843 = vpop.f32.mrb[0].mxu0
      %v844 = vadd.f32 0.0, %v843
      %v845 = vpop.f32.mrb[0].mxu0
      %846 = vmatprep.mubr.f32.mxu0 0.0
      %847 = vmatmul.mubr.f32.gmra.mrb[0].mxu0 %v713
      %v848 = vpop.f32.mrb[0].mxu0
      %v849 = vadd.f32 0.0, %v848
      %v850 = vpop.f32.mrb[0].mxu0
      %851 = vmatprep.mubr.f32.mxu0 0.0
      %852 = vmatmul.mubr.f32.gmra.mrb[0].mxu0 %v716
      %v853 = vpop.f32.mrb[0].mxu0
      %v854 = vadd.f32 0.0, %v853
      %v855 = vpop.f32.mrb[0].mxu0
      %856 = vmatprep.mubr.f32.mxu0 0.0
      %857 = vmatmul.mubr.f32.gmra.mrb[0].mxu0 %v719
      %v858 = vpop.f32.mrb[0].mxu0
      %v859 = vadd.f32 0.0, %v858
      %v860 = vpop.f32.mrb[0].mxu0
      %861 = vmatprep.mubr.f32.mxu0 0.0
      %862 = vmatmul.mubr.f32.gmra.mrb[0].mxu0 %v722
      %v863 = vpop.f32.mrb[0].mxu0
      %v864 = vadd.f32 0.0, %v863
      %v865 = vpop.f32.mrb[0].mxu0
      %866 = vmatprep.mubr.f32.mxu0 0.0
      %867 = vmatmul.mubr.f32.gmra.mrb[0].mxu0 %v725
      %v868 = vpop.f32.mrb[0].mxu0
      %v869 = vadd.f32 0.0, %v868
      %v870 = vpop.f32.mrb[0].mxu0
      %871 = vdwg.mxu0
      %v872 = vld [vmem:[%s3] sm:$0x1]
      %v874 = vlaneseq
      %v875 = vshrl.u32 %v874, 7
      %v876 = vsub.s32 0, %v875
      %v877 = vrot.slane %v872, %v876
      %v879 = vmul.f32 %v357, %v877
      %v880 = vmul.f32 %v358, %v877
      %v881 = vmul.f32 %v359, %v877
      %v882 = vmul.f32 %v360, %v877
      %v883 = vmul.f32 %v361, %v877
      %v884 = vmul.f32 %v362, %v877
      %v885 = vmul.f32 %v363, %v877
      %v886 = vmul.f32 %v364, %v877
      %v887 = vmul.f32 %v365, %v877
      %v888 = vmul.f32 %v366, %v877
      %v889 = vmul.f32 %v367, %v877
      %v890 = vmul.f32 %v368, %v877
      %v891 = vmul.f32 %v369, %v877
      %v892 = vmul.f32 %v370, %v877
      %v893 = vmul.f32 %v371, %v877
      %v894 = vmul.f32 %v372, %v877
      %v895 = vsel %vm485, %v879, 0.0
      %896 = vadd.xlane.f32.xlu0 %v895
      %v897 = vpop.xlane.xlu0 %896
      %v898 = vsel %vm485, %v880, 0.0
      %899 = vadd.xlane.f32.xlu0 %v898
      %v900 = vpop.xlane.xlu0 %899
      %v901 = vsel %vm485, %v881, 0.0
      %902 = vadd.xlane.f32.xlu0 %v901
      %v903 = vpop.xlane.xlu0 %902
      %v904 = vsel %vm485, %v882, 0.0
      %905 = vadd.xlane.f32.xlu0 %v904
      %v906 = vpop.xlane.xlu0 %905
      %v907 = vsel %vm485, %v883, 0.0
      %908 = vadd.xlane.f32.xlu0 %v907
      %v909 = vpop.xlane.xlu0 %908
      %v910 = vsel %vm485, %v884, 0.0
      %911 = vadd.xlane.f32.xlu0 %v910
      %v912 = vpop.xlane.xlu0 %911
      %v913 = vsel %vm485, %v885, 0.0
      %914 = vadd.xlane.f32.xlu0 %v913
      %v915 = vpop.xlane.xlu0 %914
      %v916 = vsel %vm485, %v886, 0.0
      %917 = vadd.xlane.f32.xlu0 %v916
      %v918 = vpop.xlane.xlu0 %917
      %v919 = vsel %vm485, %v887, 0.0
      %920 = vadd.xlane.f32.xlu0 %v919
      %v921 = vpop.xlane.xlu0 %920
      %v922 = vsel %vm485, %v888, 0.0
      %923 = vadd.xlane.f32.xlu0 %v922
      %v924 = vpop.xlane.xlu0 %923
      %v925 = vsel %vm485, %v889, 0.0
      %926 = vadd.xlane.f32.xlu0 %v925
      %v927 = vpop.xlane.xlu0 %926
      %v928 = vsel %vm485, %v890, 0.0
      %929 = vadd.xlane.f32.xlu0 %v928
      %v930 = vpop.xlane.xlu0 %929
      %v931 = vsel %vm485, %v891, 0.0
      %932 = vadd.xlane.f32.xlu0 %v931
      %v933 = vpop.xlane.xlu0 %932
      %v934 = vsel %vm485, %v892, 0.0
      %935 = vadd.xlane.f32.xlu0 %v934
      %v936 = vpop.xlane.xlu0 %935
      %v937 = vsel %vm485, %v893, 0.0
      %938 = vadd.xlane.f32.xlu0 %v937
      %v939 = vpop.xlane.xlu0 %938
      %v940 = vsel %vm485, %v894, 0.0
      %941 = vadd.xlane.f32.xlu0 %v940
      %v942 = vpop.xlane.xlu0 %941
      %v943 = vmul.f32 %v469, %v877
      %v944 = vmul.f32 %v470, %v877
      %v945 = vmul.f32 %v471, %v877
      %v946 = vmul.f32 %v472, %v877
      %v947 = vmul.f32 %v473, %v877
      %v948 = vmul.f32 %v474, %v877
      %v949 = vmul.f32 %v475, %v877
      %v950 = vmul.f32 %v476, %v877
      %v951 = vmul.f32 %v477, %v877
      %v952 = vmul.f32 %v478, %v877
      %v953 = vmul.f32 %v479, %v877
      %v954 = vmul.f32 %v480, %v877
      %v955 = vmul.f32 %v481, %v877
      %v956 = vmul.f32 %v482, %v877
      %v957 = vmul.f32 %v483, %v877
      %v958 = vmul.f32 %v484, %v877
      %v959 = vsel %vm485, %v943, 0.0
      %960 = vadd.xlane.f32.xlu0 %v959
      %v961 = vpop.xlane.xlu0 %960
      %v962 = vsel %vm485, %v944, 0.0
      %963 = vadd.xlane.f32.xlu0 %v962
      %v964 = vpop.xlane.xlu0 %963
      %v965 = vsel %vm485, %v945, 0.0
      %966 = vadd.xlane.f32.xlu0 %v965
      %v967 = vpop.xlane.xlu0 %966
      %v968 = vsel %vm485, %v946, 0.0
      %969 = vadd.xlane.f32.xlu0 %v968
      %v970 = vpop.xlane.xlu0 %969
      %v971 = vsel %vm485, %v947, 0.0
      %972 = vadd.xlane.f32.xlu0 %v971
      %v973 = vpop.xlane.xlu0 %972
      %v974 = vsel %vm485, %v948, 0.0
      %975 = vadd.xlane.f32.xlu0 %v974
      %v976 = vpop.xlane.xlu0 %975
      %v977 = vsel %vm485, %v949, 0.0
      %978 = vadd.xlane.f32.xlu0 %v977
      %v979 = vpop.xlane.xlu0 %978
      %v980 = vsel %vm485, %v950, 0.0
      %981 = vadd.xlane.f32.xlu0 %v980
      %v982 = vpop.xlane.xlu0 %981
      %v983 = vsel %vm485, %v951, 0.0
      %984 = vadd.xlane.f32.xlu0 %v983
      %v985 = vpop.xlane.xlu0 %984
      %v986 = vsel %vm485, %v952, 0.0
      %987 = vadd.xlane.f32.xlu0 %v986
      %v988 = vpop.xlane.xlu0 %987
      %v989 = vsel %vm485, %v953, 0.0
      %990 = vadd.xlane.f32.xlu0 %v989
      %v991 = vpop.xlane.xlu0 %990
      %v992 = vsel %vm485, %v954, 0.0
      %993 = vadd.xlane.f32.xlu0 %v992
      %v994 = vpop.xlane.xlu0 %993
      %v995 = vsel %vm485, %v955, 0.0
      %996 = vadd.xlane.f32.xlu0 %v995
      %v997 = vpop.xlane.xlu0 %996
      %v998 = vsel %vm485, %v956, 0.0
      %999 = vadd.xlane.f32.xlu0 %v998
      %v1000 = vpop.xlane.xlu0 %999
      %v1001 = vsel %vm485, %v957, 0.0
      %1002 = vadd.xlane.f32.xlu0 %v1001
      %v1003 = vpop.xlane.xlu0 %1002
      %v1004 = vsel %vm485, %v958, 0.0
      %1005 = vadd.xlane.f32.xlu0 %v1004
      %v1006 = vpop.xlane.xlu0 %1005
      %v1007 = vmul.f32 %v601, %v794
      %v1008 = vmul.f32 %v606, %v799
      %v1009 = vmul.f32 %v611, %v804
      %v1010 = vmul.f32 %v616, %v809
      %v1011 = vmul.f32 %v621, %v814
      %v1012 = vmul.f32 %v626, %v819
      %v1013 = vmul.f32 %v631, %v824
      %v1014 = vmul.f32 %v636, %v829
      %v1015 = vmul.f32 %v641, %v834
      %v1016 = vmul.f32 %v646, %v839
      %v1017 = vmul.f32 %v651, %v844
      %v1018 = vmul.f32 %v656, %v849
      %v1019 = vmul.f32 %v661, %v854
      %v1020 = vmul.f32 %v666, %v859
      %v1021 = vmul.f32 %v671, %v864
      %v1022 = vmul.f32 %v676, %v869
      %vm1023 = vcmask 654336
      %v1024 = vsel %vm1023, %v1007, 0.0
      %1025 = vadd.xlane.f32.xlu0 %v1024
      %v1026 = vpop.xlane.xlu0 %1025
      %v1027 = vsel %vm1023, %v1008, 0.0
      %1028 = vadd.xlane.f32.xlu0 %v1027
      %v1029 = vpop.xlane.xlu0 %1028
      %v1030 = vsel %vm1023, %v1009, 0.0
      %1031 = vadd.xlane.f32.xlu0 %v1030
      %v1032 = vpop.xlane.xlu0 %1031
      %v1033 = vsel %vm1023, %v1010, 0.0
      %1034 = vadd.xlane.f32.xlu0 %v1033
      %v1035 = vpop.xlane.xlu0 %1034
      %v1036 = vsel %vm1023, %v1011, 0.0
      %1037 = vadd.xlane.f32.xlu0 %v1036
      %v1038 = vpop.xlane.xlu0 %1037
      %v1039 = vsel %vm1023, %v1012, 0.0
      %1040 = vadd.xlane.f32.xlu0 %v1039
      %v1041 = vpop.xlane.xlu0 %1040
      %v1042 = vsel %vm1023, %v1013, 0.0
      %1043 = vadd.xlane.f32.xlu0 %v1042
      %v1044 = vpop.xlane.xlu0 %1043
      %v1045 = vsel %vm1023, %v1014, 0.0
      %1046 = vadd.xlane.f32.xlu0 %v1045
      %v1047 = vpop.xlane.xlu0 %1046
      %v1048 = vsel %vm1023, %v1015, 0.0
      %1049 = vadd.xlane.f32.xlu0 %v1048
      %v1050 = vpop.xlane.xlu0 %1049
      %v1051 = vsel %vm1023, %v1016, 0.0
      %1052 = vadd.xlane.f32.xlu0 %v1051
      %v1053 = vpop.xlane.xlu0 %1052
      %v1054 = vsel %vm1023, %v1017, 0.0
      %1055 = vadd.xlane.f32.xlu0 %v1054
      %v1056 = vpop.xlane.xlu0 %1055
      %v1057 = vsel %vm1023, %v1018, 0.0
      %1058 = vadd.xlane.f32.xlu0 %v1057
      %v1059 = vpop.xlane.xlu0 %1058
      %v1060 = vsel %vm1023, %v1019, 0.0
      %1061 = vadd.xlane.f32.xlu0 %v1060
      %v1062 = vpop.xlane.xlu0 %1061
      %v1063 = vsel %vm1023, %v1020, 0.0
      %1064 = vadd.xlane.f32.xlu0 %v1063
      %v1065 = vpop.xlane.xlu0 %1064
      %v1066 = vsel %vm1023, %v1021, 0.0
      %1067 = vadd.xlane.f32.xlu0 %v1066
      %v1068 = vpop.xlane.xlu0 %1067
      %v1069 = vsel %vm1023, %v1022, 0.0
      %1070 = vadd.xlane.f32.xlu0 %v1069
      %v1071 = vpop.xlane.xlu0 %1070
      %s1072 = sld [smem:[#allocation2]]
      %v1073 = vstv %s1072
      %v1074 = vadd.f32 %v1073, %v897
      %v1075 = vadd.f32 %v1073, %v900
      %v1076 = vadd.f32 %v1073, %v903
      %v1077 = vadd.f32 %v1073, %v906
      %v1078 = vadd.f32 %v1073, %v909
      %v1079 = vadd.f32 %v1073, %v912
      %v1080 = vadd.f32 %v1073, %v915
      %v1081 = vadd.f32 %v1073, %v918
      %v1082 = vadd.f32 %v1073, %v921
      %v1083 = vadd.f32 %v1073, %v924
      %v1084 = vadd.f32 %v1073, %v927
      %v1085 = vadd.f32 %v1073, %v930
      %v1086 = vadd.f32 %v1073, %v933
      %v1087 = vadd.f32 %v1073, %v936
      %v1088 = vadd.f32 %v1073, %v939
      %v1089 = vadd.f32 %v1073, %v942
      %v1090 = vadd.f32 %v1074, %v961
      %v1091 = vadd.f32 %v1075, %v964
      %v1092 = vadd.f32 %v1076, %v967
      %v1093 = vadd.f32 %v1077, %v970
      %v1094 = vadd.f32 %v1078, %v973
      %v1095 = vadd.f32 %v1079, %v976
      %v1096 = vadd.f32 %v1080, %v979
      %v1097 = vadd.f32 %v1081, %v982
      %v1098 = vadd.f32 %v1082, %v985
      %v1099 = vadd.f32 %v1083, %v988
      %v1100 = vadd.f32 %v1084, %v991
      %v1101 = vadd.f32 %v1085, %v994
      %v1102 = vadd.f32 %v1086, %v997
      %v1103 = vadd.f32 %v1087, %v1000
      %v1104 = vadd.f32 %v1088, %v1003
      %v1105 = vadd.f32 %v1089, %v1006
      %v1106 = vadd.f32 %v1090, %v1026
      %v1107 = vadd.f32 %v1091, %v1029
      %v1108 = vadd.f32 %v1092, %v1032
      %v1109 = vadd.f32 %v1093, %v1035
      %v1110 = vadd.f32 %v1094, %v1038
      %v1111 = vadd.f32 %v1095, %v1041
      %v1112 = vadd.f32 %v1096, %v1044
      %v1113 = vadd.f32 %v1097, %v1047
      %v1114 = vadd.f32 %v1098, %v1050
      %v1115 = vadd.f32 %v1099, %v1053
      %v1116 = vadd.f32 %v1100, %v1056
      %v1117 = vadd.f32 %v1101, %v1059
      %v1118 = vadd.f32 %v1102, %v1062
      %v1119 = vadd.f32 %v1103, %v1065
      %v1120 = vadd.f32 %v1104, %v1068
      %v1121 = vadd.f32 %v1105, %v1071
      %vm1122 = vcmask 7168
      %1123 = vst.msk [vmem:[%s249] sm:$0xff] %vm1122, %v1106
      %1124 = vst.msk [vmem:[%s249 + $0x8] sm:$0xff] %vm1122, %v1107
      %1125 = vst.msk [vmem:[%s249 + $0x10] sm:$0xff] %vm1122, %v1108
      %1126 = vst.msk [vmem:[%s249 + $0x18] sm:$0xff] %vm1122, %v1109
      %1127 = vst.msk [vmem:[%s249 + $0x20] sm:$0xff] %vm1122, %v1110
      %1128 = vst.msk [vmem:[%s249 + $0x28] sm:$0xff] %vm1122, %v1111
      %1129 = vst.msk [vmem:[%s249 + $0x30] sm:$0xff] %vm1122, %v1112
      %1130 = vst.msk [vmem:[%s249 + $0x38] sm:$0xff] %vm1122, %v1113
      %1131 = vst.msk [vmem:[%s249 + $0x40] sm:$0xff] %vm1122, %v1114
      %1132 = vst.msk [vmem:[%s249 + $0x48] sm:$0xff] %vm1122, %v1115
      %1133 = vst.msk [vmem:[%s249 + $0x50] sm:$0xff] %vm1122, %v1116
      %1134 = vst.msk [vmem:[%s249 + $0x58] sm:$0xff] %vm1122, %v1117
      %1135 = vst.msk [vmem:[%s249 + $0x60] sm:$0xff] %vm1122, %v1118
      %1136 = vst.msk [vmem:[%s249 + $0x68] sm:$0xff] %vm1122, %v1119
      %1137 = vst.msk [vmem:[%s249 + $0x70] sm:$0xff] %vm1122, %v1120
      %1138 = vst.msk [vmem:[%s249 + $0x78] sm:$0xff] %vm1122, %v1121
      %s1139 = smul.u32 16, %s17
      %p1140 = scmp.lt.s32.totalorder %s1139, 31
      %s1141 = scalar_select %p1140, %s1139, 31
      %s1142 = smul.addr %s1141, 8
      %s1143 = scalar_lea.vmem %s5, %s1142
      // Predicated region
      $region41: #{tpu_custom_call.1} parent=39 // pred_check
        %p1144 = pneg %p150
      $region42: #{tpu_custom_call.1} parent=39 // pred_check_branch
        %1146 = sbr.rel (%p1144) target = $region44
      $region43: #{tpu_custom_call.1} parent=39 // pred_region
        %s1147 = smul.u32 16, %s17
      $region44: #{tpu_custom_call.1} parent=39 // pred_fallthru
        _
    $region40: #{tpu_custom_call.1} parent=5 // pred_fallthru
      _
    %p1148 = scmp.le.s32.totalorder 2, %s12
    // Predicated region
    $region45: #{tpu_custom_call.1} parent=5 // pred_check
      %p1149 = pneg %p1148
    $region46: #{tpu_custom_call.1} parent=5 // pred_check_branch
      %1151 = sbr.rel (%p1149) target = $region48
    $region47: #{tpu_custom_call.1} parent=5 // pred_region
      %s1152 = ssub.s32 %s12, 2
      // Predicated region
      $region49: #{tpu_custom_call.1} parent=47 // pred_check
        %p1153 = pneg %p156
      $region50: #{tpu_custom_call.1} parent=47 // pred_check_branch
        %1155 = sbr.rel (%p1153) target = $region52
      $region51: #{tpu_custom_call.1} parent=47 // pred_region
        %s1156 = smul.u32 16, %s18
        %p1157 = scmp.lt.s32.totalorder %s1156, 31
        %s1158 = scalar_select %p1157, %s1156, 31
        %s1159 = smul.addr %s1158, 8
        %s1160 = scalar_lea.vmem %s5, %s1159
      $region52: #{tpu_custom_call.1} parent=47 // pred_fallthru
        _
    $region48: #{tpu_custom_call.1} parent=5 // pred_fallthru
      _
  $region6: #{tpu_custom_call.1} parent=0 // loop_footer
    %s16 = sadd.s32 1, %s12
  $region7: #{tpu_custom_call.1} parent=0 // loop_footer_branch
    %11 = sbr.rel target = $region3
  $region8: #{tpu_custom_call.1} parent=0 // loop_exit
    _

</llo_original>
